<compile_context>
chip_gen: v5e
topology: v5e:2x2
jax: 0.10.0
libtpu: 0.0.40
codegen_flags: <defaults>
</compile_context>

<pallas_src>
import functools

import jax
import jax.numpy as jnp
from jax.experimental import pallas as pl
from jax.experimental.pallas import tpu as pltpu

_SUBLANE = 8  # f32 sublane granularity for the batch (second-to-last) dim


def _round_up(x, m):
    return ((x + m - 1) // m) * m


def _fused_mlp_kernel(x_ref, *refs, n_layers):
    """Whole MLP for one batch tile; intermediate activations never leave VMEM/vregs.

    refs = (wb_0, wb_1, ..., wb_{n-1}, o_ref)
    x_ref: [tm, D0]    wb_i: [D_i + 1, D_{i+1}]  (rows 0..D_i-1 = W_i, last row = b_i)
    """
    o_ref = refs[-1]
    h = x_ref[...]
    for i in range(n_layers):                       # static unroll (traced once)
        wb_ref = refs[i]
        d_in_i = wb_ref.shape[0] - 1
        w = wb_ref[0:d_in_i, :]                     # sublane-aligned static slices
        b = wb_ref[d_in_i:d_in_i + 1, :]
        h = jnp.dot(h, w, preferred_element_type=jnp.float32) + b
        if i < n_layers - 1:
            h = jnp.maximum(h, 0.0)                 # ReLU between all but the last layer
    o_ref[...] = h.astype(o_ref.dtype)


def init_mlp_params(key, units_per_layer):
    """Deterministic init mimicking torch.nn.Linear default U[-1/sqrt(fan_in), +...]."""
    params = []
    for i in range(len(units_per_layer) - 1):
        d_in, d_out = units_per_layer[i], units_per_layer[i + 1]
        key, kw, kb = jax.random.split(key, 3)
        bound = 1.0 / jnp.sqrt(jnp.float32(d_in))
        w = jax.random.uniform(kw, (d_in, d_out), jnp.float32, -bound, bound)
        b = jax.random.uniform(kb, (d_out,), jnp.float32, -bound, bound)
        params.append((w, b))
    return params


def pack_params(params):
    """Fold each bias into its weight as an extra trailing row: [d_in+1, d_out]."""
    return [jnp.concatenate([w, b.reshape(1, -1)], axis=0) for w, b in params]


def fused_mlp_pallas(x, packed_params, *, batch_tile=256):
    """x: [B, D_in]. packed_params: list of [D_i+1, D_{i+1}] arrays. -> [B, D_out]."""
    B, d_in = x.shape
    n_layers = len(packed_params)
    d_out = packed_params[-1].shape[1]

    # 1-D batch grid: weights are loaded once (constant index_map, VMEM-resident),
    # activations are streamed/double-buffered per batch tile, batch axis "parallel"
    # so the tiles split across TensorCores (v7x) for large B. For B=8: grid=(1,).
    tm = min(_round_up(B, _SUBLANE), batch_tile)
    b_pad = _round_up(B, tm)
    x_p = jnp.pad(x, ((0, b_pad - B), (0, 0))) if b_pad != B else x
    grid = (b_pad // tm,)

    in_specs = [pl.BlockSpec((tm, d_in), lambda i: (i, 0))]
    flops = 0
    bytes_accessed = B * d_in * 4 + B * d_out * 4
    for wb in packed_params:
        in_specs.append(pl.BlockSpec(wb.shape, lambda i: (0, 0)))  # resident across grid
        flops += 2 * B * (wb.shape[0] - 1) * wb.shape[1]
        bytes_accessed += wb.size * 4

    # TODO(synk): if D_in/D_out ever grow beyond VMEM-resident weights, add (tn, tk)
    # grid axes with an f32 VMEM accumulator; size tiles against 64 MiB VMEM on v7x
    # (256-wide tn/tk for v6e/v7x MXU, 128 for v5e) and consider bf16 weights.
    out_p = pl.pallas_call(
        functools.partial(_fused_mlp_kernel, n_layers=n_layers),
        out_shape=jax.ShapeDtypeStruct((b_pad, d_out), x.dtype),
        grid=grid,
        in_specs=in_specs,
        out_specs=pl.BlockSpec((tm, d_out), lambda i: (i, 0)),
        compiler_params=pltpu.CompilerParams(dimension_semantics=("parallel",)),
        cost_estimate=pl.CostEstimate(
            flops=flops, transcendentals=0, bytes_accessed=bytes_accessed),
    )(x_p, *packed_params)

    return out_p[:B]


def mlp_reference(params, x):
    h = x
    n_layers = len(params)
    for i, (w, b) in enumerate(params):
        h = h @ w + b
        if i < n_layers - 1:
            h = jnp.maximum(h, 0.0)
    return h


if __name__ == "__main__":
    units_per_layer = [32, 64, 48, 16]  # Linear(32,64) ReLU Linear(64,48) ReLU Linear(48,16)
    batch = 8

    key = jax.random.PRNGKey(0)
    key, kx = jax.random.split(key)
    x = jax.random.normal(kx, (batch, units_per_layer[0]), jnp.float32)

    params = init_mlp_params(key, units_per_layer)
    packed_params = pack_params(params)   # packed once, outside the forward path

    fwd = jax.jit(fused_mlp_pallas)
    out = jax.block_until_ready(fwd(x, packed_params))

    ref = mlp_reference(params, x)
    assert out.shape == (batch, units_per_layer[-1])
    assert jnp.allclose(out, ref, atol=1e-5, rtol=1e-5), "mismatch vs JAX reference"

    print("KERNEL_OK")
</pallas_src>

<mosaic_0001>
module attributes {stable_mosaic.version = 11 : i64} {
  func.func @_fused_mlp_kernel(%arg0: i32, %arg1: memref<8x32xf32, #tpu.memory_space<vmem>>, %arg2: memref<33x64xf32, #tpu.memory_space<vmem>>, %arg3: memref<65x48xf32, #tpu.memory_space<vmem>>, %arg4: memref<49x16xf32, #tpu.memory_space<vmem>>, %arg5: memref<8x16xf32, #tpu.memory_space<vmem>>) attributes {dimension_semantics = [#tpu.dimension_semantics<parallel>], iteration_bounds = array<i64: 1>, scalar_prefetch = 0 : i64, scratch_operands = 0 : i64, tpu.core_type = #tpu.core_type<tc>, window_params = [{transform_indices = @transform_0, window_bounds = array<i64: 8, 32>}, {pipeline_mode = #tpu.pipeline_mode<synchronous>, transform_indices = @transform_1, window_bounds = array<i64: 33, 64>}, {pipeline_mode = #tpu.pipeline_mode<synchronous>, transform_indices = @transform_2, window_bounds = array<i64: 65, 48>}, {pipeline_mode = #tpu.pipeline_mode<synchronous>, transform_indices = @transform_3, window_bounds = array<i64: 49, 16>}, {transform_indices = @transform_4, window_bounds = array<i64: 8, 16>}]} {
    %c0 = arith.constant 0 : index
    %c0_0 = arith.constant 0 : index
    %0 = vector.load %arg1[%c0, %c0_0] : memref<8x32xf32, #tpu.memory_space<vmem>>, vector<8x32xf32>
    %c0_1 = arith.constant 0 : index
    %c0_2 = arith.constant 0 : index
    %1 = vector.load %arg2[%c0_1, %c0_2] : memref<33x64xf32, #tpu.memory_space<vmem>>, vector<32x64xf32>
    %c32 = arith.constant 32 : index
    %c0_3 = arith.constant 0 : index
    %2 = vector.load %arg2[%c32, %c0_3] : memref<33x64xf32, #tpu.memory_space<vmem>>, vector<1x64xf32>
    %cst = arith.constant dense<0.000000e+00> : vector<8x64xf32>
    %3 = tpu.matmul %0, %1, %cst {dimension_numbers = #tpu.dot_dimension_numbers<[1], [0], [0], [1], [0, 0, 1, 1], [], []>} : vector<8x32xf32>, vector<32x64xf32>, vector<8x64xf32> -> vector<8x64xf32>
    %4 = vector.broadcast %2 : vector<1x64xf32> to vector<8x64xf32>
    %5 = arith.addf %3, %4 : vector<8x64xf32>
    %cst_4 = arith.constant 0.000000e+00 : f32
    %6 = vector.broadcast %cst_4 : f32 to vector<8x64xf32>
    %7 = arith.maximumf %5, %6 : vector<8x64xf32>
    %c0_5 = arith.constant 0 : index
    %c0_6 = arith.constant 0 : index
    %8 = vector.load %arg3[%c0_5, %c0_6] : memref<65x48xf32, #tpu.memory_space<vmem>>, vector<64x48xf32>
    %c64 = arith.constant 64 : index
    %c0_7 = arith.constant 0 : index
    %9 = vector.load %arg3[%c64, %c0_7] : memref<65x48xf32, #tpu.memory_space<vmem>>, vector<1x48xf32>
    %cst_8 = arith.constant dense<0.000000e+00> : vector<8x48xf32>
    %10 = tpu.matmul %7, %8, %cst_8 {dimension_numbers = #tpu.dot_dimension_numbers<[1], [0], [0], [1], [0, 0, 1, 1], [], []>} : vector<8x64xf32>, vector<64x48xf32>, vector<8x48xf32> -> vector<8x48xf32>
    %11 = vector.broadcast %9 : vector<1x48xf32> to vector<8x48xf32>
    %12 = arith.addf %10, %11 : vector<8x48xf32>
    %cst_9 = arith.constant 0.000000e+00 : f32
    %13 = vector.broadcast %cst_9 : f32 to vector<8x48xf32>
    %14 = arith.maximumf %12, %13 : vector<8x48xf32>
    %c0_10 = arith.constant 0 : index
    %c0_11 = arith.constant 0 : index
    %15 = vector.load %arg4[%c0_10, %c0_11] : memref<49x16xf32, #tpu.memory_space<vmem>>, vector<48x16xf32>
    %c48 = arith.constant 48 : index
    %c0_12 = arith.constant 0 : index
    %16 = vector.load %arg4[%c48, %c0_12] : memref<49x16xf32, #tpu.memory_space<vmem>>, vector<1x16xf32>
    %cst_13 = arith.constant dense<0.000000e+00> : vector<8x16xf32>
    %17 = tpu.matmul %14, %15, %cst_13 {dimension_numbers = #tpu.dot_dimension_numbers<[1], [0], [0], [1], [0, 0, 1, 1], [], []>} : vector<8x48xf32>, vector<48x16xf32>, vector<8x16xf32> -> vector<8x16xf32>
    %18 = vector.broadcast %16 : vector<1x16xf32> to vector<8x16xf32>
    %19 = arith.addf %17, %18 : vector<8x16xf32>
    %c0_14 = arith.constant 0 : index
    %c0_15 = arith.constant 0 : index
    %20 = vector.load %arg5[%c0_14, %c0_15] : memref<8x16xf32, #tpu.memory_space<vmem>>, vector<8x16xf32>
    tpu.vector_store %arg5[%c0_14, %c0_15], %19 {strides = array<i32>} : memref<8x16xf32, #tpu.memory_space<vmem>>, vector<8x16xf32>,
    return
  }
  func.func @transform_0(%arg0: i32) -> (i32, i32) {
    %c0_i32 = arith.constant 0 : i32
    %c0_i32_0 = arith.constant 0 : i32
    return %arg0, %c0_i32 : i32, i32
  }
  func.func @transform_1(%arg0: i32) -> (i32, i32) {
    %c0_i32 = arith.constant 0 : i32
    %c0_i32_0 = arith.constant 0 : i32
    %c0_i32_1 = arith.constant 0 : i32
    return %c0_i32, %c0_i32_0 : i32, i32
  }
  func.func @transform_2(%arg0: i32) -> (i32, i32) {
    %c0_i32 = arith.constant 0 : i32
    %c0_i32_0 = arith.constant 0 : i32
    %c0_i32_1 = arith.constant 0 : i32
    return %c0_i32, %c0_i32_0 : i32, i32
  }
  func.func @transform_3(%arg0: i32) -> (i32, i32) {
    %c0_i32 = arith.constant 0 : i32
    %c0_i32_0 = arith.constant 0 : i32
    %c0_i32_1 = arith.constant 0 : i32
    return %c0_i32, %c0_i32_0 : i32, i32
  }
  func.func @transform_4(%arg0: i32) -> (i32, i32) {
    %c0_i32 = arith.constant 0 : i32
    %c0_i32_0 = arith.constant 0 : i32
    return %arg0, %c0_i32 : i32, i32
  }
}

</mosaic_0001>

<llo_original>
// kernel: fused_mlp_pallas.1
$region0: #{fused_mlp_pallas.1}
  #allocation0 [shape = 'u32[]', space=smem, size = 0x4, offset = 0x4, fixed_abs, tag = 'smem constant byte address 0x4 - core index']
  #allocation1 [shape = 'u32[72,128]{1,0:T(1,128)}', space=vmem, size = 0x9000, scoped, tag = 'internal scratch']
  %s0 = inlined_call_operand.vmem [shape: f32[8,32], index: 0, kind: input, shape index: {}]
  %s1 = inlined_call_operand.vmem [shape: f32[33,64], index: 1, kind: input, shape index: {}]
  %s2 = inlined_call_operand.vmem [shape: f32[65,48], index: 2, kind: input, shape index: {}]
  %s3 = inlined_call_operand.vmem [shape: f32[49,16], index: 3, kind: input, shape index: {}]
  %s4 = inlined_call_operand.hbm [shape: f32[8,16], index: 4, kind: output, shape index: {}]
  %s5 = sld [smem:[#allocation0]]
  $region26: #{fused_mlp_pallas.1} parent=0
    _
  %s7 = ssub.s32 1, %s5
  %s8 = scalar_select 0, %s7, %s5
  $region1: #{fused_mlp_pallas.1} parent=0
    #allocation2 [shape = 'u8[4096]{0}', space=vmem, size = 0x1000, scoped, tag = 'output window, operand 0, single buffered']
    #allocation3 [shape = 's32[1]{0}', space=sflag, size = 0x4, scoped, tag = 'scoped memory for fused_mlp_pallas.1']
    %9 = vsyncpa [#allocation3], 0
    // Predicated region
    $region2: #{fused_mlp_pallas.1} parent=1 // pred_check
      _
    $region3: #{fused_mlp_pallas.1} parent=1 // pred_check_branch
      %11 = sbr.rel (0) target = $region5
    $region4: #{fused_mlp_pallas.1} parent=1 // pred_region
      _
    $region5: #{fused_mlp_pallas.1} parent=1 // pred_fallthru
      _
    // Predicated region
    $region6: #{fused_mlp_pallas.1} parent=1 // pred_check
      _
    $region7: #{fused_mlp_pallas.1} parent=1 // pred_check_branch
      %13 = sbr.rel (0) target = $region9
    $region8: #{fused_mlp_pallas.1} parent=1 // pred_region
      _
    $region9: #{fused_mlp_pallas.1} parent=1 // pred_fallthru
      _
    // Predicated region
    $region10: #{fused_mlp_pallas.1} parent=1 // pred_check
      _
    $region11: #{fused_mlp_pallas.1} parent=1 // pred_check_branch
      %15 = sbr.rel (0) target = $region13
    $region12: #{fused_mlp_pallas.1} parent=1 // pred_region
      _
    $region13: #{fused_mlp_pallas.1} parent=1 // pred_fallthru
      _
    // Predicated region
    $region14: #{fused_mlp_pallas.1} parent=1 // pred_check
      _
    $region15: #{fused_mlp_pallas.1} parent=1 // pred_check_branch
      %17 = sbr.rel (0) target = $region17
    $region16: #{fused_mlp_pallas.1} parent=1 // pred_region
      _
    $region17: #{fused_mlp_pallas.1} parent=1 // pred_fallthru
      _
    %v18 = vld [vmem:[%s0] sm:$0xff]
    %v19 = vld [vmem:[%s1] sm:$0xff]
    %v20 = vld [vmem:[%s1 + $0x8] sm:$0xff]
    %v21 = vld [vmem:[%s1 + $0x10] sm:$0xff]
    %v22 = vld [vmem:[%s1 + $0x18] sm:$0xff]
    %v23 = vld [vmem:[%s1 + $0x20] sm:$0x1]
    %v24 = vperm.slane %v23, 0
    %vm25 = vcmask 261120
    %v27 = vsel %vm25, %v18, 0
    %29 = vmatpush.msra.mxu0 0.0
    %30 = vmatpush.msra.mxu0 0.0
    %31 = vmatpush.msra.mxu0 0.0
    %32 = vmatpush.msra.mxu0 0.0
    %33 = vmatpush.msra.mxu0 0.0
    %34 = vmatpush.msra.mxu0 0.0
    %35 = vmatpush.msra.mxu0 0.0
    %36 = vmatpush.msra.mxu0 0.0
    %37 = vmatpush.msra.mxu0 0.0
    %38 = vmatpush.msra.mxu0 0.0
    %39 = vmatpush.msra.mxu0 0.0
    %40 = vmatpush.msra.mxu0 0.0
    %41 = vmatpush.msra.mxu0 %v22
    %42 = vmatpush.msra.mxu0 %v21
    %43 = vmatpush.msra.mxu0 %v20
    %44 = vmatpush.msra.mxu0 %v19
    %45 = vmatmul.f32.gmra.mxu0 %v27
    %v46 = vpop.f32.mrf.mxu0
    %v47 = vadd.f32 %v24, %v46
    %48 = vdwg.mxu0
    %v49 = vmax.f32 %v47, 0.0
    %v50 = vld [vmem:[%s2] sm:$0xff]
    %v51 = vld [vmem:[%s2 + $0x8] sm:$0xff]
    %v52 = vld [vmem:[%s2 + $0x10] sm:$0xff]
    %v53 = vld [vmem:[%s2 + $0x18] sm:$0xff]
    %v54 = vld [vmem:[%s2 + $0x20] sm:$0xff]
    %v55 = vld [vmem:[%s2 + $0x28] sm:$0xff]
    %v56 = vld [vmem:[%s2 + $0x30] sm:$0xff]
    %v57 = vld [vmem:[%s2 + $0x38] sm:$0xff]
    %v58 = vld [vmem:[%s2 + $0x40] sm:$0x1]
    %v59 = vperm.slane %v58, 0
    %vm60 = vcmask 523264
    %v62 = vsel %vm60, %v49, 0
    %64 = vmatpush.msra.mxu0 0.0
    %65 = vmatpush.msra.mxu0 0.0
    %66 = vmatpush.msra.mxu0 0.0
    %67 = vmatpush.msra.mxu0 0.0
    %68 = vmatpush.msra.mxu0 0.0
    %69 = vmatpush.msra.mxu0 0.0
    %70 = vmatpush.msra.mxu0 0.0
    %71 = vmatpush.msra.mxu0 0.0
    %72 = vmatpush.msra.mxu0 %v57
    %73 = vmatpush.msra.mxu0 %v56
    %74 = vmatpush.msra.mxu0 %v55
    %75 = vmatpush.msra.mxu0 %v54
    %76 = vmatpush.msra.mxu0 %v53
    %77 = vmatpush.msra.mxu0 %v52
    %78 = vmatpush.msra.mxu0 %v51
    %79 = vmatpush.msra.mxu0 %v50
    %80 = vmatmul.f32.gmra.mxu0 %v62
    %v81 = vpop.f32.mrf.mxu0
    %v82 = vadd.f32 %v59, %v81
    %83 = vdwg.mxu0
    %v84 = vmax.f32 %v82, 0.0
    %v85 = vld [vmem:[%s3] sm:$0xff]
    %v86 = vld [vmem:[%s3 + $0x8] sm:$0xff]
    %v87 = vld [vmem:[%s3 + $0x10] sm:$0xff]
    %v88 = vld [vmem:[%s3 + $0x18] sm:$0xff]
    %v89 = vld [vmem:[%s3 + $0x20] sm:$0xff]
    %v90 = vld [vmem:[%s3 + $0x28] sm:$0xff]
    %v91 = vld [vmem:[%s3 + $0x30] sm:$0x1]
    %v92 = vperm.slane %v91, 0
    %vm93 = vcmask 392192
    %v95 = vsel %vm93, %v84, 0
    %97 = vmatpush.msra.mxu0 0.0
    %98 = vmatpush.msra.mxu0 0.0
    %99 = vmatpush.msra.mxu0 0.0
    %100 = vmatpush.msra.mxu0 0.0
    %101 = vmatpush.msra.mxu0 0.0
    %102 = vmatpush.msra.mxu0 0.0
    %103 = vmatpush.msra.mxu0 0.0
    %104 = vmatpush.msra.mxu0 0.0
    %105 = vmatpush.msra.mxu0 0.0
    %106 = vmatpush.msra.mxu0 0.0
    %107 = vmatpush.msra.mxu0 %v90
    %108 = vmatpush.msra.mxu0 %v89
    %109 = vmatpush.msra.mxu0 %v88
    %110 = vmatpush.msra.mxu0 %v87
    %111 = vmatpush.msra.mxu0 %v86
    %112 = vmatpush.msra.mxu0 %v85
    %113 = vmatmul.f32.gmra.mxu0 %v95
    %v114 = vpop.f32.mrf.mxu0
    %v115 = vadd.f32 %v92, %v114
    %116 = vdwg.mxu0
    %vm117 = vcmask 130048
    %118 = vst.msk [vmem:[#allocation2] sm:$0xff] %vm117, %v115
    // Predicated region
    $region18: #{fused_mlp_pallas.1} parent=1 // pred_check
      _
    $region19: #{fused_mlp_pallas.1} parent=1 // pred_check_branch
      %120 = sbr.rel (0) target = $region21
    $region20: #{fused_mlp_pallas.1} parent=1 // pred_region
      %122 = vsyncadd [#allocation3], 0
      %s124 = sshll.u32 [#allocation2], 4
      %s125 = int_to_ptr.vmem [resolvable:$true] %s124
      %s126 = sshll.u32 %s4, 4
      %s127 = int_to_ptr.hbm [resolvable:$true] %s126
      %129 = dma.vmem_to_hbm [thread:$0]  %s125, 128, %s127, [#allocation3]
    $region21: #{fused_mlp_pallas.1} parent=1 // pred_fallthru
      _
    // Predicated region
    $region22: #{fused_mlp_pallas.1} parent=1 // pred_check
      _
    $region23: #{fused_mlp_pallas.1} parent=1 // pred_check_branch
      %131 = sbr.rel (0) target = $region25
    $region24: #{fused_mlp_pallas.1} parent=1 // pred_region
      %133 = dma.done [#allocation3], 128
    $region25: #{fused_mlp_pallas.1} parent=1 // pred_fallthru
      _
    %134 = vsyncpa [#allocation3], 1

</llo_original>
